<compile_context>
chip_gen: v6e
topology: v6e:2x2x1
jax: 0.10.0
libtpu: 0.0.40
codegen_flags: <defaults>
</compile_context>

<pallas_src>
import jax
import jax.numpy as jnp
from jax.experimental import pallas as pl
from jax.experimental.pallas import tpu as pltpu


def _postprocess_kernel(logit0_ref, boxes_ref, coef_ref, out_ref):
    # logit0_ref: [N, 1]  class-0 logits
    # boxes_ref:  [N, 4]  (cx, cy, w, h)
    # coef_ref:   [1, 4]  f32 = [img_w, img_h, 0.5*img_w, 0.5*img_h]
    # out_ref:    [N, 5]  f32 = [x1, y1, x2, y2, score], boxes already scaled
    b = boxes_ref[...].astype(jnp.float32)

    ctr = b[:, 0:2]                       # (cx, cy)
    wh = b[:, 2:4]                        # (w, h)

    scale_wh = coef_ref[0:1, 0:2]         # [1, 2] = (img_w, img_h)
    half_scale_wh = coef_ref[0:1, 2:4]    # [1, 2] = (0.5*img_w, 0.5*img_h)

    ctr_s = ctr * scale_wh                # scaled centers
    half_s = wh * half_scale_wh           # scaled half-extents

    scores = jax.nn.sigmoid(logit0_ref[...].astype(jnp.float32))   # [N, 1]

    out_ref[...] = jnp.concatenate(
        [ctr_s - half_s, ctr_s + half_s, scores], axis=-1)


def tracker_post_process(pred_logits, pred_boxes, target_size):
    """pred_logits: [N, C], pred_boxes: [N, 4] cxcywh, target_size: (img_h, img_w).

    Returns (boxes [N,4] scaled xyxy, scores [N], labels [N]). The PyTorch
    module's Instances container is Python-side bookkeeping, not kernel work.
    """
    N, C = pred_logits.shape
    assert pred_boxes.shape == (N, 4)

    # Runtime (traced) scale coefficients -> kernel never recompiles per resolution.
    ts = jnp.asarray(target_size, dtype=jnp.float32)   # (img_h, img_w)
    img_h, img_w = ts[0], ts[1]
    coef = jnp.stack([img_w, img_h, 0.5 * img_w, 0.5 * img_h]).reshape(1, 4)

    # Only class column 0 feeds the score; don't DMA the other C-1 columns.
    logits0 = pred_logits[:, 0:1]

    out = pl.pallas_call(
        _postprocess_kernel,
        out_shape=jax.ShapeDtypeStruct((N, 5), jnp.float32),
        in_specs=[
            pl.BlockSpec(memory_space=pltpu.MemorySpace.VMEM),
            pl.BlockSpec(memory_space=pltpu.MemorySpace.VMEM),
            pl.BlockSpec(memory_space=pltpu.MemorySpace.VMEM),
        ],
        out_specs=pl.BlockSpec(memory_space=pltpu.MemorySpace.VMEM),
    )(logits0, pred_boxes, coef)

    boxes = out[:, 0:4].astype(pred_boxes.dtype)
    scores = out[:, 4].astype(pred_logits.dtype)
    # torch.full_like(scores, 0): constant zeros with scores' dtype -- no kernel work.
    labels = jnp.zeros_like(scores)
    return boxes, scores, labels


def _reference(pred_logits, pred_boxes, target_size):
    img_h, img_w = float(target_size[0]), float(target_size[1])
    scores = jax.nn.sigmoid(pred_logits[..., 0])
    cx, cy, w, h = (pred_boxes[..., 0], pred_boxes[..., 1],
                    pred_boxes[..., 2], pred_boxes[..., 3])
    boxes = jnp.stack([cx - 0.5 * w, cy - 0.5 * h, cx + 0.5 * w, cy + 0.5 * h], axis=-1)
    scale = jnp.array([img_w, img_h, img_w, img_h], dtype=jnp.float32)
    boxes = (boxes.astype(jnp.float32) * scale[None, :]).astype(pred_boxes.dtype)
    labels = jnp.zeros_like(scores)
    return boxes, scores, labels


if __name__ == "__main__":
    key = jax.random.PRNGKey(0)
    k_logits, k_boxes = jax.random.split(key)

    N, C = 16, 4                               # 16 track queries, 4 classes
    pred_logits = jax.random.normal(k_logits, (N, C), dtype=jnp.float32)
    pred_boxes = jax.random.uniform(k_boxes, (N, 4), dtype=jnp.float32)  # cxcywh in [0,1)
    target_size = (480.0, 640.0)               # (img_h, img_w)

    boxes, scores, labels = tracker_post_process(pred_logits, pred_boxes, target_size)
    jax.block_until_ready((boxes, scores, labels))

    ref_boxes, ref_scores, ref_labels = _reference(pred_logits, pred_boxes, target_size)
    assert jnp.allclose(boxes, ref_boxes, atol=1e-4, rtol=1e-4)
    assert jnp.allclose(scores, ref_scores, atol=1e-6, rtol=1e-6)
    assert jnp.allclose(labels, ref_labels)

    print("KERNEL_OK")
</pallas_src>

<mosaic_0001>
module attributes {stable_mosaic.version = 11 : i64} {
  func.func @_postprocess_kernel(%arg0: memref<16x1xf32, #tpu.memory_space<vmem>>, %arg1: memref<16x4xf32, #tpu.memory_space<vmem>>, %arg2: memref<1x4xf32, #tpu.memory_space<vmem>>, %arg3: memref<16x5xf32, #tpu.memory_space<vmem>>) attributes {dimension_semantics = [], scalar_prefetch = 0 : i64, scratch_operands = 0 : i64, tpu.core_type = #tpu.core_type<tc>} {
    %c0 = arith.constant 0 : index
    %c0_0 = arith.constant 0 : index
    %0 = vector.load %arg1[%c0, %c0_0] : memref<16x4xf32, #tpu.memory_space<vmem>>, vector<16x4xf32>
    %1 = vector.extract_strided_slice %0 {offsets = [0, 0], sizes = [16, 2], strides = [1, 1]} : vector<16x4xf32> to vector<16x2xf32>
    %2 = vector.extract_strided_slice %0 {offsets = [0, 2], sizes = [16, 2], strides = [1, 1]} : vector<16x4xf32> to vector<16x2xf32>
    %c0_1 = arith.constant 0 : index
    %c0_2 = arith.constant 0 : index
    %3 = vector.load %arg2[%c0_1, %c0_2] : memref<1x4xf32, #tpu.memory_space<vmem>>, vector<1x2xf32>
    %c0_3 = arith.constant 0 : index
    %c2 = arith.constant 2 : index
    %4 = vector.load %arg2[%c0_3, %c2] : memref<1x4xf32, #tpu.memory_space<vmem>>, vector<1x2xf32>
    %5 = vector.broadcast %3 : vector<1x2xf32> to vector<16x2xf32>
    %6 = arith.mulf %1, %5 : vector<16x2xf32>
    %7 = vector.broadcast %4 : vector<1x2xf32> to vector<16x2xf32>
    %8 = arith.mulf %2, %7 : vector<16x2xf32>
    %c0_4 = arith.constant 0 : index
    %c0_5 = arith.constant 0 : index
    %9 = vector.load %arg0[%c0_4, %c0_5] : memref<16x1xf32, #tpu.memory_space<vmem>>, vector<16x1xf32>
    %10 = arith.negf %9 : vector<16x1xf32>
    %11 = math.exp %10 : vector<16x1xf32>
    %cst = arith.constant 1.000000e+00 : f32
    %12 = vector.broadcast %cst : f32 to vector<16x1xf32>
    %13 = arith.addf %12, %11 : vector<16x1xf32>
    %14 = arith.divf %12, %13 : vector<16x1xf32>
    %15 = arith.subf %6, %8 : vector<16x2xf32>
    %16 = arith.addf %6, %8 : vector<16x2xf32>
    %17 = tpu.concatenate %15, %16, %14 in 1 : vector<16x2xf32>, vector<16x2xf32>, vector<16x1xf32> -> vector<16x5xf32>
    %c0_6 = arith.constant 0 : index
    %c0_7 = arith.constant 0 : index
    %18 = vector.load %arg3[%c0_6, %c0_7] : memref<16x5xf32, #tpu.memory_space<vmem>>, vector<16x5xf32>
    tpu.vector_store %arg3[%c0_6, %c0_7], %17 {strides = array<i32>} : memref<16x5xf32, #tpu.memory_space<vmem>>, vector<16x5xf32>,
    return
  }
}

</mosaic_0001>

<llo_original>
// kernel: tpu_custom_call.1
$region0: #{tpu_custom_call.1}
  #allocation0 [shape = 'u32[]', space=smem, size = 0x4, offset = 0x4, fixed_abs, tag = 'smem constant byte address 0x4 - core index']
  #allocation1 [shape = 'u32[144,128]{1,0:T(1,128)}', space=vmem, size = 0x12000, scoped, tag = 'internal scratch']
  %s0 = inlined_call_operand.vmem [shape: f32[16,1], index: 0, kind: input, shape index: {}]
  %s1 = inlined_call_operand.vmem [shape: f32[16,4], index: 1, kind: input, shape index: {}]
  %s2 = inlined_call_operand.vmem [shape: f32[1,4], index: 2, kind: input, shape index: {}]
  %s3 = inlined_call_operand.vmem [shape: f32[16,5], index: 3, kind: output, shape index: {}]
  %s4 = sld [smem:[#allocation0]]
  $region22: #{tpu_custom_call.1} parent=0
    _
  %s6 = ssub.s32 1, %s4
  %s7 = scalar_select 0, %s6, %s4
  // Predicated region
  $region2: #{tpu_custom_call.1} parent=0 // pred_check
    _
  $region3: #{tpu_custom_call.1} parent=0 // pred_check_branch
    %9 = sbr.rel (0) target = $region5
  $region4: #{tpu_custom_call.1} parent=0 // pred_region
    _
  $region5: #{tpu_custom_call.1} parent=0 // pred_fallthru
    _
  // Predicated region
  $region6: #{tpu_custom_call.1} parent=0 // pred_check
    _
  $region7: #{tpu_custom_call.1} parent=0 // pred_check_branch
    %11 = sbr.rel (0) target = $region9
  $region8: #{tpu_custom_call.1} parent=0 // pred_region
    _
  $region9: #{tpu_custom_call.1} parent=0 // pred_fallthru
    _
  // Predicated region
  $region10: #{tpu_custom_call.1} parent=0 // pred_check
    _
  $region11: #{tpu_custom_call.1} parent=0 // pred_check_branch
    %13 = sbr.rel (0) target = $region13
  $region12: #{tpu_custom_call.1} parent=0 // pred_region
    _
  $region13: #{tpu_custom_call.1} parent=0 // pred_fallthru
    _
  %v14 = vld [vmem:[%s1] sm:$0xff]
  %v15 = vld [vmem:[%s1 + $0x8] sm:$0xff]
  %v16 = vld [vmem:[%s2] sm:$0x1]
  %v18 = vlaneseq
  %v19 = vshrl.u32 %v18, 7
  %v20 = vsub.s32 0, %v19
  %v21 = vrot.slane %v16, %v20
  %v23 = vmul.f32 %v14, %v21
  %v24 = vmul.f32 %v15, %v21
  %v25 = vld [vmem:[%s0] sm:$0xff]
  %v26 = vld [vmem:[%s0 + $0x8] sm:$0xff]
  %v27 = vxor.u32 %v25, 2147483648
  %v28 = vxor.u32 %v26, 2147483648
  %v29 = vmul.f32 %v27, 1.442695
  %v30 = vpow.pop %v29
  %v31 = vmul.f32 %v28, 1.442695
  %v32 = vpow.pop %v31
  %v33 = vadd.f32 %v30, 1.0
  %v34 = vadd.f32 %v32, 1.0
  %v35 = vrcp.pop %v33
  %v36 = vmul.f32 1.0, %v35
  %v37 = vrcp.pop %v34
  %v38 = vmul.f32 1.0, %v37
  %41 = vrot.lane.b32.xlu0 %v23, 126
  %v42 = vpop.permute.xlu0 %41
  %43 = vrot.lane.b32.xlu0 %v24, 126
  %v44 = vpop.permute.xlu0 %43
  %v47 = vsub.f32 %v23, %v42
  %v48 = vsub.f32 %v24, %v44
  %v49 = vadd.f32 %v23, %v42
  %v50 = vadd.f32 %v24, %v44
  %53 = vrot.lane.b32.xlu0 %v49, 2
  %v54 = vpop.permute.xlu0 %53
  %55 = vrot.lane.b32.xlu0 %v50, 2
  %v56 = vpop.permute.xlu0 %55
  %61 = vrot.lane.b32.xlu0 %v36, 4
  %v62 = vpop.permute.xlu0 %61
  %63 = vrot.lane.b32.xlu0 %v38, 4
  %v64 = vpop.permute.xlu0 %63
  %vm67 = vcmask 15360
  %v68 = vsel %vm67, %v47, %v54
  %v69 = vsel %vm67, %v48, %v56
  %vm70 = vcmask 31744
  %v71 = vsel %vm70, %v68, %v62
  %v72 = vsel %vm70, %v69, %v64
  %vm73 = vcmask 39936
  %74 = vst.msk [vmem:[%s3] sm:$0xff] %vm73, %v71
  %75 = vst.msk [vmem:[%s3 + $0x8] sm:$0xff] %vm73, %v72
  // Predicated region
  $region14: #{tpu_custom_call.1} parent=0 // pred_check
    _
  $region15: #{tpu_custom_call.1} parent=0 // pred_check_branch
    %77 = sbr.rel (0) target = $region17
  $region16: #{tpu_custom_call.1} parent=0 // pred_region
    _
  $region17: #{tpu_custom_call.1} parent=0 // pred_fallthru
    _
  // Predicated region
  $region18: #{tpu_custom_call.1} parent=0 // pred_check
    _
  $region19: #{tpu_custom_call.1} parent=0 // pred_check_branch
    %79 = sbr.rel (0) target = $region21
  $region20: #{tpu_custom_call.1} parent=0 // pred_region
    _
  $region21: #{tpu_custom_call.1} parent=0 // pred_fallthru
    _

</llo_original>
